<compile_context>
chip_gen: v6e
topology: v6e:2x2x1
jax: 0.10.0
libtpu: 0.0.40
codegen_flags: <defaults>
</compile_context>

<pallas_src>
import functools

import jax
import jax.numpy as jnp
from jax.experimental import pallas as pl
from jax.experimental.pallas import tpu as pltpu


def _rnn_head_kernel(num_layers, batch, *refs):
    """Truncated tanh-RNN recurrence (2 timesteps) + fc/relu + fc1 in one kernel.

    refs layout:
      x2_ref,                          # [2*B, E]  rows 0..B-1 = t=0, rows B..2B-1 = t=1
      (wih, whh, b) * num_layers,      # [in,H], [H,H], [1,H]   (b = b_ih + b_hh)
      fcw, fcb, fc1w, fc1b,            # [H,H1], [1,H1], [H1,C], [1,C]
      out_ref                          # [B, C]
    """
    B = batch
    x2_ref = refs[0]
    layer_refs = refs[1:1 + 3 * num_layers]
    fcw_ref, fcb_ref, fc1w_ref, fc1b_ref = refs[1 + 3 * num_layers:5 + 3 * num_layers]
    out_ref = refs[-1]

    xcat = x2_ref[...].astype(jnp.float32)                 # [2B, feat] (t0 rows, then t1 rows)

    h1 = None
    for l in range(num_layers):
        wih = layer_refs[3 * l][...]                       # [in, H]
        whh = layer_refs[3 * l + 1][...]                   # [H,  H]
        b = layer_refs[3 * l + 2][...]                     # [1,  H]  (= b_ih + b_hh)

        # Hoisted input projection: both timesteps in one MXU call.
        proj = jnp.dot(xcat, wih, preferred_element_type=jnp.float32) + b   # [2B, H]

        # Serial recurrence over the 2 retained timesteps (initial hidden = 0).
        h0 = jnp.tanh(proj[:B, :])                                          # t = 0
        h1 = jnp.tanh(proj[B:, :]
                      + jnp.dot(h0, whh, preferred_element_type=jnp.float32))  # t = 1

        if l + 1 < num_layers:
            xcat = jnp.concatenate([h0, h1], axis=0)       # input slab for next layer

    # PyTorch: out[:, 1] -> top-layer hidden at timestep 1.
    feat = h1                                              # [B, H]
    hid = jnp.maximum(
        jnp.dot(feat, fcw_ref[...], preferred_element_type=jnp.float32) + fcb_ref[...],
        0.0)                                               # ReLU(fc(.)) -> [B, H1]
    logits = (jnp.dot(hid, fc1w_ref[...], preferred_element_type=jnp.float32)
              + fc1b_ref[...])                             # fc1 -> [B, C]
    out_ref[...] = logits.astype(out_ref.dtype)


def gru_model_forward(x_tokens, params):
    """Wrapper: tiny 2*B-row embedding gather in plain JAX (glue), rest in the kernel."""
    emb_table = params["embed"]                            # [V, E]
    B, T = x_tokens.shape
    assert T >= 2, "out[:, 1] requires seq_len >= 2"

    # Only timesteps 0 and 1 feed the output: gather just those rows, time-major.
    tok2 = jnp.transpose(x_tokens[:, :2], (1, 0)).reshape(-1)   # [2*B]
    x2 = jnp.take(emb_table, tok2, axis=0)                      # [2*B, E]
    # TODO(synk): fuse this 2*B-row gather into the kernel via scalar-prefetched token ids.

    num_layers = len(params["rnn"])
    num_classes = params["fc1_w"].shape[0]

    flat_inputs = [x2]
    for (wih, whh, bih, bhh) in params["rnn"]:
        flat_inputs += [wih.T, whh.T, (bih + bhh).reshape(1, -1)]
    flat_inputs += [params["fc_w"].T, params["fc_b"].reshape(1, -1),
                    params["fc1_w"].T, params["fc1_b"].reshape(1, -1)]

    kernel = functools.partial(_rnn_head_kernel, num_layers, B)
    return pl.pallas_call(
        kernel,
        out_shape=jax.ShapeDtypeStruct((B, num_classes), jnp.float32),
        in_specs=[pl.BlockSpec(memory_space=pltpu.MemorySpace.VMEM)] * len(flat_inputs),
        out_specs=pl.BlockSpec(memory_space=pltpu.MemorySpace.VMEM),
    )(*flat_inputs)


def _reference(x_tokens, params):
    """Pure-JAX reference mirroring the PyTorch forward (full T-step recurrence)."""
    emb = params["embed"][x_tokens]                        # [B, T, E]
    B, T, _ = emb.shape
    layer_in = emb
    for (wih, whh, bih, bhh) in params["rnn"]:
        H = whh.shape[0]
        h = jnp.zeros((B, H), jnp.float32)
        outs = []
        for t in range(T):
            h = jnp.tanh(layer_in[:, t, :] @ wih.T + bih + h @ whh.T + bhh)
            outs.append(h)
        layer_in = jnp.stack(outs, axis=1)
    feat = layer_in[:, 1]
    hid = jnp.maximum(feat @ params["fc_w"].T + params["fc_b"], 0.0)
    return hid @ params["fc1_w"].T + params["fc1_b"]


def _init_params(key, input_size, embedding_dim, hidden_size, hidden_size1,
                 num_layers, num_classes):
    keys = iter(jax.random.split(key, 4 + 4 * num_layers + 4))
    scale = 1.0 / jnp.sqrt(hidden_size)
    params = {
        "embed": jax.random.normal(next(keys), (input_size, embedding_dim), jnp.float32),
        "rnn": [],
        "fc_w": jax.random.uniform(next(keys), (hidden_size1, hidden_size), jnp.float32, -scale, scale),
        "fc_b": jax.random.uniform(next(keys), (hidden_size1,), jnp.float32, -scale, scale),
        "fc1_w": jax.random.uniform(next(keys), (num_classes, hidden_size1), jnp.float32, -scale, scale),
        "fc1_b": jax.random.uniform(next(keys), (num_classes,), jnp.float32, -scale, scale),
    }
    for l in range(num_layers):
        in_dim = embedding_dim if l == 0 else hidden_size
        params["rnn"].append((
            jax.random.uniform(next(keys), (hidden_size, in_dim), jnp.float32, -scale, scale),
            jax.random.uniform(next(keys), (hidden_size, hidden_size), jnp.float32, -scale, scale),
            jax.random.uniform(next(keys), (hidden_size,), jnp.float32, -scale, scale),
            jax.random.uniform(next(keys), (hidden_size,), jnp.float32, -scale, scale),
        ))
    return params


if __name__ == "__main__":
    # Small, module-consistent shapes
    input_size = 50        # vocab size for nn.Embedding
    embedding_dim = 16
    hidden_size = 32
    hidden_size1 = 32
    num_layers = 2
    num_classes = 8
    batch, seq = 2, 8

    root = jax.random.PRNGKey(0)
    pkey, xkey = jax.random.split(root)
    params = _init_params(pkey, input_size, embedding_dim, hidden_size,
                          hidden_size1, num_layers, num_classes)
    x = jax.random.randint(xkey, (batch, seq), 0, input_size, dtype=jnp.int32)

    out = gru_model_forward(x, params)
    out = jax.block_until_ready(out)

    ref = jax.block_until_ready(_reference(x, params))
    assert out.shape == (batch, num_classes)
    assert jnp.allclose(out, ref, rtol=1e-4, atol=1e-4), "mismatch vs reference"

    print("KERNEL_OK")
</pallas_src>

<mosaic_0001>
module attributes {stable_mosaic.version = 11 : i64} {
  func.func @_rnn_head_kernel(%arg0: memref<4x16xf32, #tpu.memory_space<vmem>>, %arg1: memref<16x32xf32, #tpu.memory_space<vmem>>, %arg2: memref<32x32xf32, #tpu.memory_space<vmem>>, %arg3: memref<1x32xf32, #tpu.memory_space<vmem>>, %arg4: memref<32x32xf32, #tpu.memory_space<vmem>>, %arg5: memref<32x32xf32, #tpu.memory_space<vmem>>, %arg6: memref<1x32xf32, #tpu.memory_space<vmem>>, %arg7: memref<32x32xf32, #tpu.memory_space<vmem>>, %arg8: memref<1x32xf32, #tpu.memory_space<vmem>>, %arg9: memref<32x8xf32, #tpu.memory_space<vmem>>, %arg10: memref<1x8xf32, #tpu.memory_space<vmem>>, %arg11: memref<2x8xf32, #tpu.memory_space<vmem>>) attributes {dimension_semantics = [], scalar_prefetch = 0 : i64, scratch_operands = 0 : i64, tpu.core_type = #tpu.core_type<tc>} {
    %c0 = arith.constant 0 : index
    %c0_0 = arith.constant 0 : index
    %0 = vector.load %arg0[%c0, %c0_0] : memref<4x16xf32, #tpu.memory_space<vmem>>, vector<4x16xf32>
    %c0_1 = arith.constant 0 : index
    %c0_2 = arith.constant 0 : index
    %1 = vector.load %arg1[%c0_1, %c0_2] : memref<16x32xf32, #tpu.memory_space<vmem>>, vector<16x32xf32>
    %c0_3 = arith.constant 0 : index
    %c0_4 = arith.constant 0 : index
    %2 = vector.load %arg2[%c0_3, %c0_4] : memref<32x32xf32, #tpu.memory_space<vmem>>, vector<32x32xf32>
    %c0_5 = arith.constant 0 : index
    %c0_6 = arith.constant 0 : index
    %3 = vector.load %arg3[%c0_5, %c0_6] : memref<1x32xf32, #tpu.memory_space<vmem>>, vector<1x32xf32>
    %cst = arith.constant dense<0.000000e+00> : vector<4x32xf32>
    %4 = tpu.matmul %0, %1, %cst {dimension_numbers = #tpu.dot_dimension_numbers<[1], [0], [0], [1], [0, 0, 1, 1], [], []>} : vector<4x16xf32>, vector<16x32xf32>, vector<4x32xf32> -> vector<4x32xf32>
    %5 = vector.broadcast %3 : vector<1x32xf32> to vector<4x32xf32>
    %6 = arith.addf %4, %5 : vector<4x32xf32>
    %7 = vector.extract_strided_slice %6 {offsets = [0, 0], sizes = [2, 32], strides = [1, 1]} : vector<4x32xf32> to vector<2x32xf32>
    %8 = math.tanh %7 : vector<2x32xf32>
    %9 = vector.extract_strided_slice %6 {offsets = [2, 0], sizes = [2, 32], strides = [1, 1]} : vector<4x32xf32> to vector<2x32xf32>
    %cst_7 = arith.constant dense<0.000000e+00> : vector<2x32xf32>
    %10 = tpu.matmul %8, %2, %cst_7 {dimension_numbers = #tpu.dot_dimension_numbers<[1], [0], [0], [1], [0, 0, 1, 1], [], []>} : vector<2x32xf32>, vector<32x32xf32>, vector<2x32xf32> -> vector<2x32xf32>
    %11 = arith.addf %9, %10 : vector<2x32xf32>
    %12 = math.tanh %11 : vector<2x32xf32>
    %13 = tpu.concatenate %8, %12 in 0 : vector<2x32xf32>, vector<2x32xf32> -> vector<4x32xf32>
    %c0_8 = arith.constant 0 : index
    %c0_9 = arith.constant 0 : index
    %14 = vector.load %arg4[%c0_8, %c0_9] : memref<32x32xf32, #tpu.memory_space<vmem>>, vector<32x32xf32>
    %c0_10 = arith.constant 0 : index
    %c0_11 = arith.constant 0 : index
    %15 = vector.load %arg5[%c0_10, %c0_11] : memref<32x32xf32, #tpu.memory_space<vmem>>, vector<32x32xf32>
    %c0_12 = arith.constant 0 : index
    %c0_13 = arith.constant 0 : index
    %16 = vector.load %arg6[%c0_12, %c0_13] : memref<1x32xf32, #tpu.memory_space<vmem>>, vector<1x32xf32>
    %cst_14 = arith.constant dense<0.000000e+00> : vector<4x32xf32>
    %17 = tpu.matmul %13, %14, %cst_14 {dimension_numbers = #tpu.dot_dimension_numbers<[1], [0], [0], [1], [0, 0, 1, 1], [], []>} : vector<4x32xf32>, vector<32x32xf32>, vector<4x32xf32> -> vector<4x32xf32>
    %18 = vector.broadcast %16 : vector<1x32xf32> to vector<4x32xf32>
    %19 = arith.addf %17, %18 : vector<4x32xf32>
    %20 = vector.extract_strided_slice %19 {offsets = [0, 0], sizes = [2, 32], strides = [1, 1]} : vector<4x32xf32> to vector<2x32xf32>
    %21 = math.tanh %20 : vector<2x32xf32>
    %22 = vector.extract_strided_slice %19 {offsets = [2, 0], sizes = [2, 32], strides = [1, 1]} : vector<4x32xf32> to vector<2x32xf32>
    %cst_15 = arith.constant dense<0.000000e+00> : vector<2x32xf32>
    %23 = tpu.matmul %21, %15, %cst_15 {dimension_numbers = #tpu.dot_dimension_numbers<[1], [0], [0], [1], [0, 0, 1, 1], [], []>} : vector<2x32xf32>, vector<32x32xf32>, vector<2x32xf32> -> vector<2x32xf32>
    %24 = arith.addf %22, %23 : vector<2x32xf32>
    %25 = math.tanh %24 : vector<2x32xf32>
    %c0_16 = arith.constant 0 : index
    %c0_17 = arith.constant 0 : index
    %26 = vector.load %arg7[%c0_16, %c0_17] : memref<32x32xf32, #tpu.memory_space<vmem>>, vector<32x32xf32>
    %cst_18 = arith.constant dense<0.000000e+00> : vector<2x32xf32>
    %27 = tpu.matmul %25, %26, %cst_18 {dimension_numbers = #tpu.dot_dimension_numbers<[1], [0], [0], [1], [0, 0, 1, 1], [], []>} : vector<2x32xf32>, vector<32x32xf32>, vector<2x32xf32> -> vector<2x32xf32>
    %c0_19 = arith.constant 0 : index
    %c0_20 = arith.constant 0 : index
    %28 = vector.load %arg8[%c0_19, %c0_20] : memref<1x32xf32, #tpu.memory_space<vmem>>, vector<1x32xf32>
    %29 = vector.broadcast %28 : vector<1x32xf32> to vector<2x32xf32>
    %30 = arith.addf %27, %29 : vector<2x32xf32>
    %cst_21 = arith.constant 0.000000e+00 : f32
    %31 = vector.broadcast %cst_21 : f32 to vector<2x32xf32>
    %32 = arith.maximumf %30, %31 : vector<2x32xf32>
    %c0_22 = arith.constant 0 : index
    %c0_23 = arith.constant 0 : index
    %33 = vector.load %arg9[%c0_22, %c0_23] : memref<32x8xf32, #tpu.memory_space<vmem>>, vector<32x8xf32>
    %cst_24 = arith.constant dense<0.000000e+00> : vector<2x8xf32>
    %34 = tpu.matmul %32, %33, %cst_24 {dimension_numbers = #tpu.dot_dimension_numbers<[1], [0], [0], [1], [0, 0, 1, 1], [], []>} : vector<2x32xf32>, vector<32x8xf32>, vector<2x8xf32> -> vector<2x8xf32>
    %c0_25 = arith.constant 0 : index
    %c0_26 = arith.constant 0 : index
    %35 = vector.load %arg10[%c0_25, %c0_26] : memref<1x8xf32, #tpu.memory_space<vmem>>, vector<1x8xf32>
    %36 = vector.broadcast %35 : vector<1x8xf32> to vector<2x8xf32>
    %37 = arith.addf %34, %36 : vector<2x8xf32>
    %c0_27 = arith.constant 0 : index
    %c0_28 = arith.constant 0 : index
    %38 = vector.load %arg11[%c0_27, %c0_28] : memref<2x8xf32, #tpu.memory_space<vmem>>, vector<2x8xf32>
    tpu.vector_store %arg11[%c0_27, %c0_28], %37 {strides = array<i32>} : memref<2x8xf32, #tpu.memory_space<vmem>>, vector<2x8xf32>,
    return
  }
}

</mosaic_0001>

<llo_original>
// kernel: tpu_custom_call.1
$region0: #{tpu_custom_call.1}
  #allocation0 [shape = 'u32[]', space=smem, size = 0x4, offset = 0x4, fixed_abs, tag = 'smem constant byte address 0x4 - core index']
  #allocation1 [shape = 'u32[144,128]{1,0:T(1,128)}', space=vmem, size = 0x12000, scoped, tag = 'internal scratch']
  %s0 = inlined_call_operand.vmem [shape: f32[4,16], index: 0, kind: input, shape index: {}]
  %s1 = inlined_call_operand.hbm [shape: f32[16,32], index: 1, kind: input, shape index: {}]
  %s2 = inlined_call_operand.vmem [shape: f32[32,32], index: 2, kind: input, shape index: {}]
  %s3 = inlined_call_operand.vmem [shape: f32[1,32], index: 3, kind: input, shape index: {}]
  %s4 = inlined_call_operand.hbm [shape: f32[32,32], index: 4, kind: input, shape index: {}]
  %s5 = inlined_call_operand.hbm [shape: f32[32,32], index: 5, kind: input, shape index: {}]
  %s6 = inlined_call_operand.vmem [shape: f32[1,32], index: 6, kind: input, shape index: {}]
  %s7 = inlined_call_operand.hbm [shape: f32[32,32], index: 7, kind: input, shape index: {}]
  %s8 = inlined_call_operand.vmem [shape: f32[1,32], index: 8, kind: input, shape index: {}]
  %s9 = inlined_call_operand.vmem [shape: f32[32,8], index: 9, kind: input, shape index: {}]
  %s10 = inlined_call_operand.vmem [shape: f32[1,8], index: 10, kind: input, shape index: {}]
  %s11 = inlined_call_operand.hbm [shape: f32[2,8], index: 11, kind: output, shape index: {}]
  %s12 = sld [smem:[#allocation0]]
  $region70: #{tpu_custom_call.1} parent=0
    _
  %s14 = ssub.s32 1, %s12
  %s15 = scalar_select 0, %s14, %s12
  $region1: #{tpu_custom_call.1} parent=0
    #allocation2 [shape = 'u8[8192]{0}', space=vmem, size = 0x2000, scoped, tag = 'input window, operand 1, single buffered']
    #allocation3 [shape = 's32[1]{0}', space=sflag, size = 0x4, scoped, tag = 'scoped memory for tpu_custom_call.1']
    #allocation4 [shape = 's32[1]{0}', space=sflag, size = 0x4, scoped, tag = 'scoped memory for tpu_custom_call.1']
    #allocation5 [shape = 'u8[16384]{0}', space=vmem, size = 0x4000, scoped, tag = 'input window, operand 4, single buffered']
    #allocation6 [shape = 's32[1]{0}', space=sflag, size = 0x4, scoped, tag = 'scoped memory for tpu_custom_call.1']
    #allocation7 [shape = 'u8[16384]{0}', space=vmem, size = 0x4000, scoped, tag = 'input window, operand 5, single buffered']
    #allocation8 [shape = 'u8[16384]{0}', space=vmem, size = 0x4000, scoped, tag = 'input window, operand 7, single buffered']
    #allocation9 [shape = 's32[1]{0}', space=sflag, size = 0x4, scoped, tag = 'scoped memory for tpu_custom_call.1']
    #allocation10 [shape = 'u8[1024]{0}', space=vmem, size = 0x400, scoped, tag = 'output window, operand 0, single buffered']
    %16 = vsyncpa [#allocation3], 0
    %17 = vsyncpa [#allocation6], 0
    %18 = vsyncpa [#allocation9], 0
    %19 = vsyncpa [#allocation4], 0
    // Predicated region
    $region2: #{tpu_custom_call.1} parent=1 // pred_check
      _
    $region3: #{tpu_custom_call.1} parent=1 // pred_check_branch
      %21 = sbr.rel (0) target = $region5
    $region4: #{tpu_custom_call.1} parent=1 // pred_region
      _
    $region5: #{tpu_custom_call.1} parent=1 // pred_fallthru
      _
    // Predicated region
    $region6: #{tpu_custom_call.1} parent=1 // pred_check
      _
    $region7: #{tpu_custom_call.1} parent=1 // pred_check_branch
      %23 = sbr.rel (0) target = $region9
    $region8: #{tpu_custom_call.1} parent=1 // pred_region
      %s25 = ssub.s32 256, 256
      %26 = vsyncadd [#allocation3], %s25
      %s27 = sshll.u32 [#allocation2], 4
      %s28 = int_to_ptr.vmem [resolvable:$true] %s27
      %33 = dma.hbm_to_vmem [thread:$0]  %s1, 256, %s28, [#allocation3], 128, 128, 8
    $region9: #{tpu_custom_call.1} parent=1 // pred_fallthru
      _
    // Predicated region
    $region10: #{tpu_custom_call.1} parent=1 // pred_check
      _
    $region11: #{tpu_custom_call.1} parent=1 // pred_check_branch
      %35 = sbr.rel (0) target = $region13
    $region12: #{tpu_custom_call.1} parent=1 // pred_region
      _
    $region13: #{tpu_custom_call.1} parent=1 // pred_fallthru
      _
    // Predicated region
    $region14: #{tpu_custom_call.1} parent=1 // pred_check
      _
    $region15: #{tpu_custom_call.1} parent=1 // pred_check_branch
      %37 = sbr.rel (0) target = $region17
    $region16: #{tpu_custom_call.1} parent=1 // pred_region
      _
    $region17: #{tpu_custom_call.1} parent=1 // pred_fallthru
      _
    // Predicated region
    $region18: #{tpu_custom_call.1} parent=1 // pred_check
      _
    $region19: #{tpu_custom_call.1} parent=1 // pred_check_branch
      %39 = sbr.rel (0) target = $region21
    $region20: #{tpu_custom_call.1} parent=1 // pred_region
      %s41 = ssub.s32 512, 512
      %42 = vsyncadd [#allocation6], %s41
      %s43 = sshll.u32 [#allocation5], 4
      %s44 = int_to_ptr.vmem [resolvable:$true] %s43
      %49 = dma.hbm_to_vmem [thread:$0]  %s4, 512, %s44, [#allocation6], 128, 128, 8
    $region21: #{tpu_custom_call.1} parent=1 // pred_fallthru
      _
    // Predicated region
    $region22: #{tpu_custom_call.1} parent=1 // pred_check
      _
    $region23: #{tpu_custom_call.1} parent=1 // pred_check_branch
      %51 = sbr.rel (0) target = $region25
    $region24: #{tpu_custom_call.1} parent=1 // pred_region
      %s53 = ssub.s32 512, 512
      %54 = vsyncadd [#allocation6], %s53
      %s55 = sshll.u32 [#allocation7], 4
      %s56 = int_to_ptr.vmem [resolvable:$true] %s55
      %61 = dma.hbm_to_vmem [thread:$0]  %s5, 512, %s56, [#allocation6], 128, 128, 8
    $region25: #{tpu_custom_call.1} parent=1 // pred_fallthru
      _
    // Predicated region
    $region26: #{tpu_custom_call.1} parent=1 // pred_check
      _
    $region27: #{tpu_custom_call.1} parent=1 // pred_check_branch
      %63 = sbr.rel (0) target = $region29
    $region28: #{tpu_custom_call.1} parent=1 // pred_region
      _
    $region29: #{tpu_custom_call.1} parent=1 // pred_fallthru
      _
    // Predicated region
    $region30: #{tpu_custom_call.1} parent=1 // pred_check
      _
    $region31: #{tpu_custom_call.1} parent=1 // pred_check_branch
      %65 = sbr.rel (0) target = $region33
    $region32: #{tpu_custom_call.1} parent=1 // pred_region
      %s67 = ssub.s32 512, 512
      %68 = vsyncadd [#allocation9], %s67
      %s69 = sshll.u32 [#allocation8], 4
      %s70 = int_to_ptr.vmem [resolvable:$true] %s69
      %75 = dma.hbm_to_vmem [thread:$0]  %s7, 512, %s70, [#allocation9], 128, 128, 8
    $region33: #{tpu_custom_call.1} parent=1 // pred_fallthru
      _
    // Predicated region
    $region34: #{tpu_custom_call.1} parent=1 // pred_check
      _
    $region35: #{tpu_custom_call.1} parent=1 // pred_check_branch
      %77 = sbr.rel (0) target = $region37
    $region36: #{tpu_custom_call.1} parent=1 // pred_region
      _
    $region37: #{tpu_custom_call.1} parent=1 // pred_fallthru
      _
    // Predicated region
    $region38: #{tpu_custom_call.1} parent=1 // pred_check
      _
    $region39: #{tpu_custom_call.1} parent=1 // pred_check_branch
      %79 = sbr.rel (0) target = $region41
    $region40: #{tpu_custom_call.1} parent=1 // pred_region
      _
    $region41: #{tpu_custom_call.1} parent=1 // pred_fallthru
      _
    // Predicated region
    $region42: #{tpu_custom_call.1} parent=1 // pred_check
      _
    $region43: #{tpu_custom_call.1} parent=1 // pred_check_branch
      %81 = sbr.rel (0) target = $region45
    $region44: #{tpu_custom_call.1} parent=1 // pred_region
      _
    $region45: #{tpu_custom_call.1} parent=1 // pred_fallthru
      _
    // Predicated region
    $region46: #{tpu_custom_call.1} parent=1 // pred_check
      _
    $region47: #{tpu_custom_call.1} parent=1 // pred_check_branch
      %83 = sbr.rel (0) target = $region49
    $region48: #{tpu_custom_call.1} parent=1 // pred_region
      %84 = dma.done [#allocation3], 256
    $region49: #{tpu_custom_call.1} parent=1 // pred_fallthru
      _
    // Predicated region
    $region50: #{tpu_custom_call.1} parent=1 // pred_check
      _
    $region51: #{tpu_custom_call.1} parent=1 // pred_check_branch
      %86 = sbr.rel (0) target = $region53
    $region52: #{tpu_custom_call.1} parent=1 // pred_region
      %87 = dma.done [#allocation6], 512
    $region53: #{tpu_custom_call.1} parent=1 // pred_fallthru
      _
    // Predicated region
    $region54: #{tpu_custom_call.1} parent=1 // pred_check
      _
    $region55: #{tpu_custom_call.1} parent=1 // pred_check_branch
      %89 = sbr.rel (0) target = $region57
    $region56: #{tpu_custom_call.1} parent=1 // pred_region
      %90 = dma.done [#allocation6], 512
    $region57: #{tpu_custom_call.1} parent=1 // pred_fallthru
      _
    // Predicated region
    $region58: #{tpu_custom_call.1} parent=1 // pred_check
      _
    $region59: #{tpu_custom_call.1} parent=1 // pred_check_branch
      %92 = sbr.rel (0) target = $region61
    $region60: #{tpu_custom_call.1} parent=1 // pred_region
      %93 = dma.done [#allocation9], 512
    $region61: #{tpu_custom_call.1} parent=1 // pred_fallthru
      _
    %v94 = vld [vmem:[%s0] sm:$0xf]
    %v95 = vld [vmem:[#allocation2] sm:$0xff]
    %v96 = vld [vmem:[#allocation2 + $0x8] sm:$0xff]
    %v97 = vld [vmem:[%s2] sm:$0xff]
    %v98 = vld [vmem:[%s2 + $0x8] sm:$0xff]
    %v99 = vld [vmem:[%s2 + $0x10] sm:$0xff]
    %v100 = vld [vmem:[%s2 + $0x18] sm:$0xff]
    %v101 = vld [vmem:[%s3] sm:$0x1]
    %v103 = vlaneseq
    %v104 = vshrl.u32 %v103, 7
    %v105 = vsub.s32 0, %v104
    %v106 = vrot.slane %v101, %v105
    %vm108 = vcmask 130048
    %v110 = vsel %vm108, %v94, 0
    %112 = vmatprep.subr.mxu0 0.0
    %113 = vmatpush1.msra.mxu0 0.0
    %114 = vmatprep.subr.mxu0 0.0
    %115 = vmatpush1.msra.mxu0 0.0
    %116 = vmatprep.subr.mxu0 0.0
    %117 = vmatpush1.msra.mxu0 0.0
    %118 = vmatprep.subr.mxu0 0.0
    %119 = vmatpush1.msra.mxu0 0.0
    %120 = vmatprep.subr.mxu0 0.0
    %121 = vmatpush1.msra.mxu0 0.0
    %122 = vmatprep.subr.mxu0 0.0
    %123 = vmatpush1.msra.mxu0 0.0
    %124 = vmatprep.subr.mxu0 0.0
    %125 = vmatpush1.msra.mxu0 0.0
    %126 = vmatprep.subr.mxu0 0.0
    %127 = vmatpush1.msra.mxu0 0.0
    %128 = vmatprep.subr.mxu0 0.0
    %129 = vmatpush1.msra.mxu0 0.0
    %130 = vmatprep.subr.mxu0 0.0
    %131 = vmatpush1.msra.mxu0 0.0
    %132 = vmatprep.subr.mxu0 0.0
    %133 = vmatpush1.msra.mxu0 0.0
    %134 = vmatprep.subr.mxu0 0.0
    %135 = vmatpush1.msra.mxu0 0.0
    %136 = vmatprep.subr.mxu0 0.0
    %137 = vmatpush1.msra.mxu0 0.0
    %138 = vmatprep.subr.mxu0 0.0
    %139 = vmatpush1.msra.mxu0 0.0
    %140 = vmatprep.subr.mxu0 0.0
    %141 = vmatpush1.msra.mxu0 %v96
    %142 = vmatprep.subr.mxu0 0.0
    %143 = vmatpush1.msra.mxu0 %v95
    %144 = vmatprep.subr.mxu0 0.0
    %145 = vmatpush2.msra.mxu0 0.0
    %146 = vmatprep.subr.mxu0 0.0
    %147 = vmatpush2.msra.mxu0 0.0
    %148 = vmatprep.subr.mxu0 0.0
    %149 = vmatpush2.msra.mxu0 0.0
    %150 = vmatprep.subr.mxu0 0.0
    %151 = vmatpush2.msra.mxu0 0.0
    %152 = vmatprep.subr.mxu0 0.0
    %153 = vmatpush2.msra.mxu0 0.0
    %154 = vmatprep.subr.mxu0 0.0
    %155 = vmatpush2.msra.mxu0 0.0
    %156 = vmatprep.subr.mxu0 0.0
    %157 = vmatpush2.msra.mxu0 0.0
    %158 = vmatprep.subr.mxu0 0.0
    %159 = vmatpush2.msra.mxu0 0.0
    %160 = vmatprep.subr.mxu0 0.0
    %161 = vmatpush2.msra.mxu0 0.0
    %162 = vmatprep.subr.mxu0 0.0
    %163 = vmatpush2.msra.mxu0 0.0
    %164 = vmatprep.subr.mxu0 0.0
    %165 = vmatpush2.msra.mxu0 0.0
    %166 = vmatprep.subr.mxu0 0.0
    %167 = vmatpush2.msra.mxu0 0.0
    %168 = vmatprep.subr.mxu0 0.0
    %169 = vmatpush2.msra.mxu0 0.0
    %170 = vmatprep.subr.mxu0 0.0
    %171 = vmatpush2.msra.mxu0 0.0
    %172 = vmatprep.subr.mxu0 0.0
    %173 = vmatpush2.msra.mxu0 0.0
    %174 = vmatprep.subr.mxu0 0.0
    %175 = vmatpush2.msra.mxu0 0.0
    %176 = vmatprep.mubr.f32.mxu0 0.0
    %177 = vmatmul.mubr.f32.gmra.mxu0 %v110
    %v178 = vpop.f32.mrf.mxu0
    %v179 = vadd.f32 %v106, %v178
    %v180 = vpop.f32.mrf.mxu0
    %181 = vdwg.mxu0
    %v182 = vtanh.pop %v179
    %vm183 = vcmask 261120
    %v185 = vsel %vm183, %v182, 0
    %187 = vmatprep.subr.mxu0 0.0
    %188 = vmatpush1.msra.mxu0 0.0
    %189 = vmatprep.subr.mxu0 0.0
    %190 = vmatpush1.msra.mxu0 0.0
    %191 = vmatprep.subr.mxu0 0.0
    %192 = vmatpush1.msra.mxu0 0.0
    %193 = vmatprep.subr.mxu0 0.0
    %194 = vmatpush1.msra.mxu0 0.0
    %195 = vmatprep.subr.mxu0 0.0
    %196 = vmatpush1.msra.mxu0 0.0
    %197 = vmatprep.subr.mxu0 0.0
    %198 = vmatpush1.msra.mxu0 0.0
    %199 = vmatprep.subr.mxu0 0.0
    %200 = vmatpush1.msra.mxu0 0.0
    %201 = vmatprep.subr.mxu0 0.0
    %202 = vmatpush1.msra.mxu0 0.0
    %203 = vmatprep.subr.mxu0 0.0
    %204 = vmatpush1.msra.mxu0 0.0
    %205 = vmatprep.subr.mxu0 0.0
    %206 = vmatpush1.msra.mxu0 0.0
    %207 = vmatprep.subr.mxu0 0.0
    %208 = vmatpush1.msra.mxu0 0.0
    %209 = vmatprep.subr.mxu0 0.0
    %210 = vmatpush1.msra.mxu0 0.0
    %211 = vmatprep.subr.mxu0 0.0
    %212 = vmatpush1.msra.mxu0 %v100
    %213 = vmatprep.subr.mxu0 0.0
    %214 = vmatpush1.msra.mxu0 %v99
    %215 = vmatprep.subr.mxu0 0.0
    %216 = vmatpush1.msra.mxu0 %v98
    %217 = vmatprep.subr.mxu0 0.0
    %218 = vmatpush1.msra.mxu0 %v97
    %219 = vmatprep.subr.mxu0 0.0
    %220 = vmatpush2.msra.mxu0 0.0
    %221 = vmatprep.subr.mxu0 0.0
    %222 = vmatpush2.msra.mxu0 0.0
    %223 = vmatprep.subr.mxu0 0.0
    %224 = vmatpush2.msra.mxu0 0.0
    %225 = vmatprep.subr.mxu0 0.0
    %226 = vmatpush2.msra.mxu0 0.0
    %227 = vmatprep.subr.mxu0 0.0
    %228 = vmatpush2.msra.mxu0 0.0
    %229 = vmatprep.subr.mxu0 0.0
    %230 = vmatpush2.msra.mxu0 0.0
    %231 = vmatprep.subr.mxu0 0.0
    %232 = vmatpush2.msra.mxu0 0.0
    %233 = vmatprep.subr.mxu0 0.0
    %234 = vmatpush2.msra.mxu0 0.0
    %235 = vmatprep.subr.mxu0 0.0
    %236 = vmatpush2.msra.mxu0 0.0
    %237 = vmatprep.subr.mxu0 0.0
    %238 = vmatpush2.msra.mxu0 0.0
    %239 = vmatprep.subr.mxu0 0.0
    %240 = vmatpush2.msra.mxu0 0.0
    %241 = vmatprep.subr.mxu0 0.0
    %242 = vmatpush2.msra.mxu0 0.0
    %243 = vmatprep.subr.mxu0 0.0
    %244 = vmatpush2.msra.mxu0 0.0
    %245 = vmatprep.subr.mxu0 0.0
    %246 = vmatpush2.msra.mxu0 0.0
    %247 = vmatprep.subr.mxu0 0.0
    %248 = vmatpush2.msra.mxu0 0.0
    %249 = vmatprep.subr.mxu0 0.0
    %250 = vmatpush2.msra.mxu0 0.0
    %251 = vmatprep.mubr.f32.mxu0 0.0
    %252 = vmatmul.mubr.f32.gmra.mxu0 %v185
    %v253 = vpop.f32.mrf.mxu0
    %v254 = vadd.f32 0.0, %v253
    %v255 = vpop.f32.mrf.mxu0
    %256 = vdwg.mxu0
    %v258 = vrot.slane %v254, 6
    %v260 = vadd.f32 %v179, %v258
    %v261 = vtanh.pop %v260
    %vm262 = vcmask 1041408
    %v263 = vsel %vm262, %v182, %v261
    %v264 = vld [vmem:[#allocation5] sm:$0xff]
    %v265 = vld [vmem:[#allocation5 + $0x8] sm:$0xff]
    %v266 = vld [vmem:[#allocation5 + $0x10] sm:$0xff]
    %v267 = vld [vmem:[#allocation5 + $0x18] sm:$0xff]
    %v268 = vld [vmem:[#allocation7] sm:$0xff]
    %v269 = vld [vmem:[#allocation7 + $0x8] sm:$0xff]
    %v270 = vld [vmem:[#allocation7 + $0x10] sm:$0xff]
    %v271 = vld [vmem:[#allocation7 + $0x18] sm:$0xff]
    %v272 = vld [vmem:[%s6] sm:$0x1]
    %v274 = vlaneseq
    %v275 = vshrl.u32 %v274, 7
    %v276 = vsub.s32 0, %v275
    %v277 = vrot.slane %v272, %v276
    %v280 = vsel %vm183, %v263, 0
    %282 = vmatprep.subr.mxu0 0.0
    %283 = vmatpush1.msra.mxu0 0.0
    %284 = vmatprep.subr.mxu0 0.0
    %285 = vmatpush1.msra.mxu0 0.0
    %286 = vmatprep.subr.mxu0 0.0
    %287 = vmatpush1.msra.mxu0 0.0
    %288 = vmatprep.subr.mxu0 0.0
    %289 = vmatpush1.msra.mxu0 0.0
    %290 = vmatprep.subr.mxu0 0.0
    %291 = vmatpush1.msra.mxu0 0.0
    %292 = vmatprep.subr.mxu0 0.0
    %293 = vmatpush1.msra.mxu0 0.0
    %294 = vmatprep.subr.mxu0 0.0
    %295 = vmatpush1.msra.mxu0 0.0
    %296 = vmatprep.subr.mxu0 0.0
    %297 = vmatpush1.msra.mxu0 0.0
    %298 = vmatprep.subr.mxu0 0.0
    %299 = vmatpush1.msra.mxu0 0.0
    %300 = vmatprep.subr.mxu0 0.0
    %301 = vmatpush1.msra.mxu0 0.0
    %302 = vmatprep.subr.mxu0 0.0
    %303 = vmatpush1.msra.mxu0 0.0
    %304 = vmatprep.subr.mxu0 0.0
    %305 = vmatpush1.msra.mxu0 0.0
    %306 = vmatprep.subr.mxu0 0.0
    %307 = vmatpush1.msra.mxu0 %v267
    %308 = vmatprep.subr.mxu0 0.0
    %309 = vmatpush1.msra.mxu0 %v266
    %310 = vmatprep.subr.mxu0 0.0
    %311 = vmatpush1.msra.mxu0 %v265
    %312 = vmatprep.subr.mxu0 0.0
    %313 = vmatpush1.msra.mxu0 %v264
    %314 = vmatprep.subr.mxu0 0.0
    %315 = vmatpush2.msra.mxu0 0.0
    %316 = vmatprep.subr.mxu0 0.0
    %317 = vmatpush2.msra.mxu0 0.0
    %318 = vmatprep.subr.mxu0 0.0
    %319 = vmatpush2.msra.mxu0 0.0
    %320 = vmatprep.subr.mxu0 0.0
    %321 = vmatpush2.msra.mxu0 0.0
    %322 = vmatprep.subr.mxu0 0.0
    %323 = vmatpush2.msra.mxu0 0.0
    %324 = vmatprep.subr.mxu0 0.0
    %325 = vmatpush2.msra.mxu0 0.0
    %326 = vmatprep.subr.mxu0 0.0
    %327 = vmatpush2.msra.mxu0 0.0
    %328 = vmatprep.subr.mxu0 0.0
    %329 = vmatpush2.msra.mxu0 0.0
    %330 = vmatprep.subr.mxu0 0.0
    %331 = vmatpush2.msra.mxu0 0.0
    %332 = vmatprep.subr.mxu0 0.0
    %333 = vmatpush2.msra.mxu0 0.0
    %334 = vmatprep.subr.mxu0 0.0
    %335 = vmatpush2.msra.mxu0 0.0
    %336 = vmatprep.subr.mxu0 0.0
    %337 = vmatpush2.msra.mxu0 0.0
    %338 = vmatprep.subr.mxu0 0.0
    %339 = vmatpush2.msra.mxu0 0.0
    %340 = vmatprep.subr.mxu0 0.0
    %341 = vmatpush2.msra.mxu0 0.0
    %342 = vmatprep.subr.mxu0 0.0
    %343 = vmatpush2.msra.mxu0 0.0
    %344 = vmatprep.subr.mxu0 0.0
    %345 = vmatpush2.msra.mxu0 0.0
    %346 = vmatprep.mubr.f32.mxu0 0.0
    %347 = vmatmul.mubr.f32.gmra.mxu0 %v280
    %v348 = vpop.f32.mrf.mxu0
    %v349 = vadd.f32 %v277, %v348
    %v350 = vpop.f32.mrf.mxu0
    %351 = vdwg.mxu0
    %v352 = vtanh.pop %v349
    %v354 = vsel %vm183, %v352, 0
    %356 = vmatprep.subr.mxu0 0.0
    %357 = vmatpush1.msra.mxu0 0.0
    %358 = vmatprep.subr.mxu0 0.0
    %359 = vmatpush1.msra.mxu0 0.0
    %360 = vmatprep.subr.mxu0 0.0
    %361 = vmatpush1.msra.mxu0 0.0
    %362 = vmatprep.subr.mxu0 0.0
    %363 = vmatpush1.msra.mxu0 0.0
    %364 = vmatprep.subr.mxu0 0.0
    %365 = vmatpush1.msra.mxu0 0.0
    %366 = vmatprep.subr.mxu0 0.0
    %367 = vmatpush1.msra.mxu0 0.0
    %368 = vmatprep.subr.mxu0 0.0
    %369 = vmatpush1.msra.mxu0 0.0
    %370 = vmatprep.subr.mxu0 0.0
    %371 = vmatpush1.msra.mxu0 0.0
    %372 = vmatprep.subr.mxu0 0.0
    %373 = vmatpush1.msra.mxu0 0.0
    %374 = vmatprep.subr.mxu0 0.0
    %375 = vmatpush1.msra.mxu0 0.0
    %376 = vmatprep.subr.mxu0 0.0
    %377 = vmatpush1.msra.mxu0 0.0
    %378 = vmatprep.subr.mxu0 0.0
    %379 = vmatpush1.msra.mxu0 0.0
    %380 = vmatprep.subr.mxu0 0.0
    %381 = vmatpush1.msra.mxu0 %v271
    %382 = vmatprep.subr.mxu0 0.0
    %383 = vmatpush1.msra.mxu0 %v270
    %384 = vmatprep.subr.mxu0 0.0
    %385 = vmatpush1.msra.mxu0 %v269
    %386 = vmatprep.subr.mxu0 0.0
    %387 = vmatpush1.msra.mxu0 %v268
    %388 = vmatprep.subr.mxu0 0.0
    %389 = vmatpush2.msra.mxu0 0.0
    %390 = vmatprep.subr.mxu0 0.0
    %391 = vmatpush2.msra.mxu0 0.0
    %392 = vmatprep.subr.mxu0 0.0
    %393 = vmatpush2.msra.mxu0 0.0
    %394 = vmatprep.subr.mxu0 0.0
    %395 = vmatpush2.msra.mxu0 0.0
    %396 = vmatprep.subr.mxu0 0.0
    %397 = vmatpush2.msra.mxu0 0.0
    %398 = vmatprep.subr.mxu0 0.0
    %399 = vmatpush2.msra.mxu0 0.0
    %400 = vmatprep.subr.mxu0 0.0
    %401 = vmatpush2.msra.mxu0 0.0
    %402 = vmatprep.subr.mxu0 0.0
    %403 = vmatpush2.msra.mxu0 0.0
    %404 = vmatprep.subr.mxu0 0.0
    %405 = vmatpush2.msra.mxu0 0.0
    %406 = vmatprep.subr.mxu0 0.0
    %407 = vmatpush2.msra.mxu0 0.0
    %408 = vmatprep.subr.mxu0 0.0
    %409 = vmatpush2.msra.mxu0 0.0
    %410 = vmatprep.subr.mxu0 0.0
    %411 = vmatpush2.msra.mxu0 0.0
    %412 = vmatprep.subr.mxu0 0.0
    %413 = vmatpush2.msra.mxu0 0.0
    %414 = vmatprep.subr.mxu0 0.0
    %415 = vmatpush2.msra.mxu0 0.0
    %416 = vmatprep.subr.mxu0 0.0
    %417 = vmatpush2.msra.mxu0 0.0
    %418 = vmatprep.subr.mxu0 0.0
    %419 = vmatpush2.msra.mxu0 0.0
    %420 = vmatprep.mubr.f32.mxu0 0.0
    %421 = vmatmul.mubr.f32.gmra.mxu0 %v354
    %v422 = vpop.f32.mrf.mxu0
    %v423 = vadd.f32 0.0, %v422
    %v424 = vpop.f32.mrf.mxu0
    %425 = vdwg.mxu0
    %v427 = vrot.slane %v423, 6
    %v429 = vadd.f32 %v349, %v427
    %v430 = vtanh.pop %v429
    %v431 = vld [vmem:[#allocation8] sm:$0xff]
    %v432 = vld [vmem:[#allocation8 + $0x8] sm:$0xff]
    %v433 = vld [vmem:[#allocation8 + $0x10] sm:$0xff]
    %v434 = vld [vmem:[#allocation8 + $0x18] sm:$0xff]
    %v435 = vld [vmem:[%s8] sm:$0x1]
    %v437 = vlaneseq
    %v438 = vshrl.u32 %v437, 7
    %v439 = vsub.s32 0, %v438
    %v440 = vrot.slane %v435, %v439
    %v443 = vrot.slane %v430, 2
    %v444 = vsel %vm183, %v443, 0
    %446 = vmatprep.subr.mxu0 0.0
    %447 = vmatpush1.msra.mxu0 0.0
    %448 = vmatprep.subr.mxu0 0.0
    %449 = vmatpush1.msra.mxu0 0.0
    %450 = vmatprep.subr.mxu0 0.0
    %451 = vmatpush1.msra.mxu0 0.0
    %452 = vmatprep.subr.mxu0 0.0
    %453 = vmatpush1.msra.mxu0 0.0
    %454 = vmatprep.subr.mxu0 0.0
    %455 = vmatpush1.msra.mxu0 0.0
    %456 = vmatprep.subr.mxu0 0.0
    %457 = vmatpush1.msra.mxu0 0.0
    %458 = vmatprep.subr.mxu0 0.0
    %459 = vmatpush1.msra.mxu0 0.0
    %460 = vmatprep.subr.mxu0 0.0
    %461 = vmatpush1.msra.mxu0 0.0
    %462 = vmatprep.subr.mxu0 0.0
    %463 = vmatpush1.msra.mxu0 0.0
    %464 = vmatprep.subr.mxu0 0.0
    %465 = vmatpush1.msra.mxu0 0.0
    %466 = vmatprep.subr.mxu0 0.0
    %467 = vmatpush1.msra.mxu0 0.0
    %468 = vmatprep.subr.mxu0 0.0
    %469 = vmatpush1.msra.mxu0 0.0
    %470 = vmatprep.subr.mxu0 0.0
    %471 = vmatpush1.msra.mxu0 %v434
    %472 = vmatprep.subr.mxu0 0.0
    %473 = vmatpush1.msra.mxu0 %v433
    %474 = vmatprep.subr.mxu0 0.0
    %475 = vmatpush1.msra.mxu0 %v432
    %476 = vmatprep.subr.mxu0 0.0
    %477 = vmatpush1.msra.mxu0 %v431
    %478 = vmatprep.subr.mxu0 0.0
    %479 = vmatpush2.msra.mxu0 0.0
    %480 = vmatprep.subr.mxu0 0.0
    %481 = vmatpush2.msra.mxu0 0.0
    %482 = vmatprep.subr.mxu0 0.0
    %483 = vmatpush2.msra.mxu0 0.0
    %484 = vmatprep.subr.mxu0 0.0
    %485 = vmatpush2.msra.mxu0 0.0
    %486 = vmatprep.subr.mxu0 0.0
    %487 = vmatpush2.msra.mxu0 0.0
    %488 = vmatprep.subr.mxu0 0.0
    %489 = vmatpush2.msra.mxu0 0.0
    %490 = vmatprep.subr.mxu0 0.0
    %491 = vmatpush2.msra.mxu0 0.0
    %492 = vmatprep.subr.mxu0 0.0
    %493 = vmatpush2.msra.mxu0 0.0
    %494 = vmatprep.subr.mxu0 0.0
    %495 = vmatpush2.msra.mxu0 0.0
    %496 = vmatprep.subr.mxu0 0.0
    %497 = vmatpush2.msra.mxu0 0.0
    %498 = vmatprep.subr.mxu0 0.0
    %499 = vmatpush2.msra.mxu0 0.0
    %500 = vmatprep.subr.mxu0 0.0
    %501 = vmatpush2.msra.mxu0 0.0
    %502 = vmatprep.subr.mxu0 0.0
    %503 = vmatpush2.msra.mxu0 0.0
    %504 = vmatprep.subr.mxu0 0.0
    %505 = vmatpush2.msra.mxu0 0.0
    %506 = vmatprep.subr.mxu0 0.0
    %507 = vmatpush2.msra.mxu0 0.0
    %508 = vmatprep.subr.mxu0 0.0
    %509 = vmatpush2.msra.mxu0 0.0
    %510 = vmatprep.mubr.f32.mxu0 0.0
    %511 = vmatmul.mubr.f32.gmra.mxu0 %v444
    %v512 = vpop.f32.mrf.mxu0
    %v513 = vadd.f32 %v440, %v512
    %v514 = vpop.f32.mrf.mxu0
    %515 = vdwg.mxu0
    %v516 = vmax.f32 %v513, 0.0
    %v517 = vld [vmem:[%s9] sm:$0xff]
    %v518 = vld [vmem:[%s9 + $0x8] sm:$0xff]
    %v519 = vld [vmem:[%s9 + $0x10] sm:$0xff]
    %v520 = vld [vmem:[%s9 + $0x18] sm:$0xff]
    %v521 = vld [vmem:[%s10] sm:$0x1]
    %v523 = vlaneseq
    %v524 = vshrl.u32 %v523, 7
    %v525 = vsub.s32 0, %v524
    %v526 = vrot.slane %v521, %v525
    %v529 = vsel %vm183, %v516, 0
    %531 = vmatprep.subr.mxu0 0.0
    %532 = vmatpush1.msra.mxu0 0.0
    %533 = vmatprep.subr.mxu0 0.0
    %534 = vmatpush1.msra.mxu0 0.0
    %535 = vmatprep.subr.mxu0 0.0
    %536 = vmatpush1.msra.mxu0 0.0
    %537 = vmatprep.subr.mxu0 0.0
    %538 = vmatpush1.msra.mxu0 0.0
    %539 = vmatprep.subr.mxu0 0.0
    %540 = vmatpush1.msra.mxu0 0.0
    %541 = vmatprep.subr.mxu0 0.0
    %542 = vmatpush1.msra.mxu0 0.0
    %543 = vmatprep.subr.mxu0 0.0
    %544 = vmatpush1.msra.mxu0 0.0
    %545 = vmatprep.subr.mxu0 0.0
    %546 = vmatpush1.msra.mxu0 0.0
    %547 = vmatprep.subr.mxu0 0.0
    %548 = vmatpush1.msra.mxu0 0.0
    %549 = vmatprep.subr.mxu0 0.0
    %550 = vmatpush1.msra.mxu0 0.0
    %551 = vmatprep.subr.mxu0 0.0
    %552 = vmatpush1.msra.mxu0 0.0
    %553 = vmatprep.subr.mxu0 0.0
    %554 = vmatpush1.msra.mxu0 0.0
    %555 = vmatprep.subr.mxu0 0.0
    %556 = vmatpush1.msra.mxu0 %v520
    %557 = vmatprep.subr.mxu0 0.0
    %558 = vmatpush1.msra.mxu0 %v519
    %559 = vmatprep.subr.mxu0 0.0
    %560 = vmatpush1.msra.mxu0 %v518
    %561 = vmatprep.subr.mxu0 0.0
    %562 = vmatpush1.msra.mxu0 %v517
    %563 = vmatprep.subr.mxu0 0.0
    %564 = vmatpush2.msra.mxu0 0.0
    %565 = vmatprep.subr.mxu0 0.0
    %566 = vmatpush2.msra.mxu0 0.0
    %567 = vmatprep.subr.mxu0 0.0
    %568 = vmatpush2.msra.mxu0 0.0
    %569 = vmatprep.subr.mxu0 0.0
    %570 = vmatpush2.msra.mxu0 0.0
    %571 = vmatprep.subr.mxu0 0.0
    %572 = vmatpush2.msra.mxu0 0.0
    %573 = vmatprep.subr.mxu0 0.0
    %574 = vmatpush2.msra.mxu0 0.0
    %575 = vmatprep.subr.mxu0 0.0
    %576 = vmatpush2.msra.mxu0 0.0
    %577 = vmatprep.subr.mxu0 0.0
    %578 = vmatpush2.msra.mxu0 0.0
    %579 = vmatprep.subr.mxu0 0.0
    %580 = vmatpush2.msra.mxu0 0.0
    %581 = vmatprep.subr.mxu0 0.0
    %582 = vmatpush2.msra.mxu0 0.0
    %583 = vmatprep.subr.mxu0 0.0
    %584 = vmatpush2.msra.mxu0 0.0
    %585 = vmatprep.subr.mxu0 0.0
    %586 = vmatpush2.msra.mxu0 0.0
    %587 = vmatprep.subr.mxu0 0.0
    %588 = vmatpush2.msra.mxu0 0.0
    %589 = vmatprep.subr.mxu0 0.0
    %590 = vmatpush2.msra.mxu0 0.0
    %591 = vmatprep.subr.mxu0 0.0
    %592 = vmatpush2.msra.mxu0 0.0
    %593 = vmatprep.subr.mxu0 0.0
    %594 = vmatpush2.msra.mxu0 0.0
    %595 = vmatprep.mubr.f32.mxu0 0.0
    %596 = vmatmul.mubr.f32.gmra.mxu0 %v529
    %v597 = vpop.f32.mrf.mxu0
    %v598 = vadd.f32 %v526, %v597
    %v599 = vpop.f32.mrf.mxu0
    %600 = vdwg.mxu0
    %vm601 = vcmask 58368
    %602 = vst.msk [vmem:[#allocation10] sm:$0x3] %vm601, %v598
    // Predicated region
    $region62: #{tpu_custom_call.1} parent=1 // pred_check
      _
    $region63: #{tpu_custom_call.1} parent=1 // pred_check_branch
      %604 = sbr.rel (0) target = $region65
    $region64: #{tpu_custom_call.1} parent=1 // pred_region
      %s606 = ssub.s32 32, 32
      %607 = vsyncadd [#allocation4], %s606
      %s609 = sshll.u32 [#allocation10], 4
      %s610 = int_to_ptr.vmem [resolvable:$true] %s609
      %612 = dma.vmem_to_hbm [thread:$0]  %s610, 32, %s11, [#allocation4]
    $region65: #{tpu_custom_call.1} parent=1 // pred_fallthru
      _
    // Predicated region
    $region66: #{tpu_custom_call.1} parent=1 // pred_check
      _
    $region67: #{tpu_custom_call.1} parent=1 // pred_check_branch
      %614 = sbr.rel (0) target = $region69
    $region68: #{tpu_custom_call.1} parent=1 // pred_region
      %615 = dma.done [#allocation4], 32
    $region69: #{tpu_custom_call.1} parent=1 // pred_fallthru
      _
    %616 = vsyncpa [#allocation3], 1
    %617 = vsyncpa [#allocation6], 1
    %618 = vsyncpa [#allocation9], 1
    %619 = vsyncpa [#allocation4], 1

</llo_original>
